<compile_context>
chip_gen: v5e
topology: v5e:2x2
jax: 0.10.0
libtpu: 0.0.40
codegen_flags: <defaults>
</compile_context>

<pallas_src>
import jax
import jax.numpy as jnp
from jax.experimental import pallas as pl
from jax.experimental.pallas import tpu as pltpu

_LANE = 128                 # TPU lane width
_MAX_TILE_ROWS = 2048       # max physical output rows per grid step
_SINGLE_BUF_TABLE_BYTES = 2 << 20   # single-buffer the resident table above this

_VMEM_CAP = None


def _round_up(a, b):
    return (a + b - 1) // b * b


def _cdiv(a, b):
    return -(-a // b)


def _vmem_capacity():
    """Per-core VMEM capacity in bytes (falls back to the v7x 64 MiB floor)."""
    global _VMEM_CAP
    if _VMEM_CAP is None:
        cap = 64 << 20
        try:
            got = int(pltpu.get_tpu_info().vmem_capacity_bytes)
            if (16 << 20) <= got <= (1 << 30):
                cap = got
        except Exception:
            pass
        _VMEM_CAP = cap
    return _VMEM_CAP


def _resident_spec(shape, single_buffer):
    """Constant-index (grid-resident) block; single-buffered for big tables."""
    index_map = lambda i: (0, 0)
    if single_buffer:
        try:
            return pl.BlockSpec(shape, index_map, pipeline_mode=pl.Buffered(1))
        except TypeError:
            pass  # older jax without BlockSpec.pipeline_mode
    return pl.BlockSpec(shape, index_map)


def _choose_tiling(r_total, w, r_tab, table_bytes):
    """Pick (tile_rows, padded_rows): as large as the VMEM budget allows, but
    at least two grid steps when there is enough work (v7x has 2 TensorCores)."""
    cap = _vmem_capacity()
    budget = max(4 << 20, 3 * cap // 8 - table_bytes)
    # double-buffered ids+targets (lane-padded), double-buffered logits tile,
    # ~6 tile-sized f32 in-kernel temporaries (iotas / one-hots / products).
    bytes_per_row = 4 * (2 * 2 * _LANE + 2 * w + 6 * max(w, r_tab))
    rows_fit = max(8, int(budget // bytes_per_row) // 8 * 8)
    max_tile = min(_MAX_TILE_ROWS, rows_fit)

    r8 = _round_up(max(r_total, 1), 8)
    n_tiles = _cdiv(r8, max_tile)
    if n_tiles == 1 and r8 >= 16:
        n_tiles = 2                      # split so both v7x cores get a tile
    tile_r = _round_up(_cdiv(r8, n_tiles), 8)
    r_pad = _round_up(r8, tile_r)
    return tile_r, r_pad


def _compiler_params(tile_r, r_tab, w, table_buffers, n_id_inputs):
    cap = _vmem_capacity()
    need = (table_buffers * r_tab * w * 4          # resident table buffer(s)
            + 2 * tile_r * w * 4                   # double-buffered logits tile
            + n_id_inputs * 2 * tile_r * _LANE * 4  # lane-padded id/target tiles
            + 6 * tile_r * max(r_tab, w) * 4       # in-kernel temporaries
            + (1 << 20))
    limit = int(min(3 * cap // 4, max(2 * need, 32 << 20)))
    return pltpu.CompilerParams(dimension_semantics=("parallel",),
                                vmem_limit_bytes=limit)


def _cost_estimate(rows, r_tab, w, k, with_loss):
    flops = 2 * rows * r_tab * w + (6 * rows * w if with_loss else 0)
    bytes_accessed = (rows * k * 4 * (2 if with_loss else 1)   # ids (+ targets)
                      + r_tab * w * 4                          # table
                      + rows * w * 4                           # logits store
                      + (r_tab * 4 if with_loss else 0))
    return pl.CostEstimate(flops=flops, transcendentals=0,
                           bytes_accessed=bytes_accessed)


def _make_kernel(k, v_real, n_valid, n_logical_pad, with_loss):
    """Embedding gather as one-hot @ (block-diagonal) table on the MXU.

    Packing: k logical token rows share one 128-lane output row.  The one-hot
    for packed row r has a 1 at lane ids[r, j] + j*V for every slot j; the
    table is block-diagonal, so one matmul yields all k logical rows laid out
    contiguously along lanes (fully lane-dense store, no pad columns).
    """
    need_mask = with_loss and (n_logical_pad != n_valid)

    def kernel(*refs):
        if with_loss:
            x_ref, tgt_ref, lse_ref, emb_ref, logits_ref, loss_ref = refs
        else:
            x_ref, emb_ref, logits_ref = refs

        tile_r = x_ref.shape[0]
        r_tab, w = emb_ref.shape

        ids = x_ref[...]                                            # (tile_r, k)
        col_tab = jax.lax.broadcasted_iota(jnp.int32, (tile_r, r_tab), 1)

        if need_mask:
            row = jax.lax.broadcasted_iota(jnp.int32, (tile_r, 1), 0)
            base_row = (pl.program_id(0) * tile_r + row) * k        # slot-0 row id

        hot = None
        for j in range(k):
            off = ids[:, j:j + 1]
            if j:
                off = off + j * v_real
            eq = col_tab == off
            if need_mask:                     # zero padded rows' contributions
                eq = jnp.logical_and(eq, base_row + j < n_valid)
            hot = eq if hot is None else jnp.logical_or(hot, eq)
        onehot = hot.astype(jnp.float32)                            # (tile_r, r_tab)

        logits = jnp.dot(onehot, emb_ref[...],
                         preferred_element_type=jnp.float32)        # (tile_r, w)
        logits_ref[...] = logits                                    # lane-dense store

        if with_loss:
            # log-sum-exp per row == lse_table[id]; gather it via the same
            # one-hot (no per-token exp/max work in the kernel).
            lse_of_id = onehot * lse_ref[...]                       # (tile_r, r_tab)

            tgt = tgt_ref[...]                                      # (tile_r, k)
            col_w = jax.lax.broadcasted_iota(jnp.int32, (tile_r, w), 1)
            hot_t = None
            for j in range(k):
                off = tgt[:, j:j + 1]
                if j:
                    off = off + j * v_real
                eq = col_w == off
                hot_t = eq if hot_t is None else jnp.logical_or(hot_t, eq)
            picked = jnp.where(hot_t, logits, 0.0)                  # (tile_r, w)

            # Per-tile partial sum -> tiny SMEM output; mean finalized outside.
            loss_ref[0, 0] = jnp.sum(lse_of_id) - jnp.sum(picked)

    return kernel


def _bigram_forward_impl(x, embedding, target=None):
    """Pallas equivalent of BigramModel.forward."""
    B, T = x.shape
    V = embedding.shape[0]
    N = B * T

    emb = embedding.astype(jnp.float32)

    # ---- table layout: packed (block-diagonal) for 128 % V == 0, else padded ----
    if V <= _LANE and _LANE % V == 0:
        k = _LANE // V
        w = k * V                                  # == 128, lane-dense, no pad cols
        table = jnp.kron(jnp.eye(k, dtype=jnp.float32), emb) if k > 1 else emb
    else:
        k = 1
        w = _round_up(V, _LANE)
        table = jnp.pad(emb, ((0, 0), (0, w - V))) if w != V else emb
    r_tab = k * V
    table_bytes = r_tab * w * 4
    single_buf_table = table_bytes > _SINGLE_BUF_TABLE_BYTES
    table_buffers = 1 if single_buf_table else 2

    # ---- tiling over packed output rows ----
    r_total = _cdiv(N, k)
    tile_r, r_pad = _choose_tiling(r_total, w, r_tab, table_buffers * table_bytes)
    num_tiles = r_pad // tile_r
    n_pad = r_pad * k                              # padded logical row count

    x_ids = x.reshape(-1).astype(jnp.int32)
    if n_pad != N:
        x_ids = jnp.pad(x_ids, (0, n_pad - N))     # pad with id 0 (valid table row)
    x_ids = x_ids.reshape(r_pad, k)

    id_spec = pl.BlockSpec((tile_r, k), lambda i: (i, 0))
    emb_spec = _resident_spec((r_tab, w), single_buf_table)
    logits_spec = pl.BlockSpec((tile_r, w), lambda i: (i, 0))

    if target is None:
        # ---------------- inference: logits only ----------------
        logits_pad = pl.pallas_call(
            _make_kernel(k, V, N, n_pad, with_loss=False),
            grid=(num_tiles,),
            in_specs=[id_spec, emb_spec],
            out_specs=logits_spec,
            out_shape=jax.ShapeDtypeStruct((r_pad, w), jnp.float32),
            compiler_params=_compiler_params(tile_r, r_tab, w, table_buffers, 1),
            cost_estimate=_cost_estimate(r_pad, r_tab, w, k, False),
        )(x_ids, table)

        if k > 1:
            logits = logits_pad.reshape(n_pad, V)      # free row-major reshape
            if n_pad != N:
                logits = logits[:N]
        else:
            logits = logits_pad
            if r_pad != N or w != V:
                logits = logits_pad[:N, :V]
        return logits.reshape(B, T, V), None

    # ---------------- training: logits + fused cross-entropy ----------------
    tgt_ids = target.reshape(-1).astype(jnp.int32)
    if n_pad != N:
        tgt_ids = jnp.pad(tgt_ids, (0, n_pad - N))
    tgt_ids = tgt_ids.reshape(r_pad, k)

    # Hoisted log-sum-exp: one value per table row, computed once per call.
    lse_tab = jax.nn.logsumexp(emb, axis=-1)                       # (V,)
    lse_row = (jnp.tile(lse_tab, k) if k > 1 else lse_tab).reshape(1, r_tab)
    lse_spec = pl.BlockSpec((1, r_tab), lambda i: (0, 0))

    logits_pad, loss_parts = pl.pallas_call(
        _make_kernel(k, V, N, n_pad, with_loss=True),
        grid=(num_tiles,),
        in_specs=[id_spec, id_spec, lse_spec, emb_spec],
        out_specs=(
            logits_spec,
            pl.BlockSpec((1, 1), lambda i: (i, 0),
                         memory_space=pltpu.MemorySpace.SMEM),
        ),
        out_shape=(
            jax.ShapeDtypeStruct((r_pad, w), jnp.float32),
            jax.ShapeDtypeStruct((num_tiles, 1), jnp.float32),
        ),
        compiler_params=_compiler_params(tile_r, r_tab, w, table_buffers, 2),
        cost_estimate=_cost_estimate(r_pad, r_tab, w, k, True),
    )(x_ids, tgt_ids, lse_row, table)

    if k > 1:
        logits = logits_pad.reshape(n_pad, V)
        if n_pad != N:
            logits = logits[:N]
    else:
        logits = logits_pad
        if r_pad != N or w != V:
            logits = logits_pad[:N, :V]

    loss = jnp.sum(loss_parts) / jnp.float32(N)
    return logits, loss


# jit so per-call table prep (cast / block-diag / lse) fuses with the kernel
# launch and compiles once per shape/signature.
bigram_forward = jax.jit(_bigram_forward_impl)


def reference_forward(x, embedding, target=None):
    """Pure-JAX reference mirroring the PyTorch module."""
    logits = embedding[x]                      # (B, T, V)
    if target is None:
        return logits, None
    B, T, V = logits.shape
    lf = logits.reshape(B * T, V)
    tf = target.reshape(B * T)
    lse = jax.nn.logsumexp(lf, axis=-1)
    picked = lf[jnp.arange(B * T), tf]
    return lf, jnp.mean(lse - picked)


if __name__ == "__main__":
    key = jax.random.PRNGKey(0)
    k_emb, k_x, k_t = jax.random.split(key, 3)

    vocab_size = 32
    B, T = 2, 8

    # nn.Embedding default init: N(0, 1)
    embedding = jax.random.normal(k_emb, (vocab_size, vocab_size), dtype=jnp.float32)
    x = jax.random.randint(k_x, (B, T), 0, vocab_size, dtype=jnp.int32)
    target = jax.random.randint(k_t, (B, T), 0, vocab_size, dtype=jnp.int32)

    # With target: (B*T, V) logits + scalar loss (packed lane-dense output).
    logits, loss = bigram_forward(x, embedding, target)
    jax.block_until_ready((logits, loss))

    # Without target: (B, T, V) logits, loss None (logits-only kernel variant).
    logits_nt, loss_nt = bigram_forward(x, embedding, None)
    jax.block_until_ready(logits_nt)

    ref_logits, ref_loss = reference_forward(x, embedding, target)
    assert loss_nt is None
    assert logits_nt.shape == (B, T, vocab_size)
    assert logits.shape == (B * T, vocab_size)
    assert jnp.allclose(logits, ref_logits, atol=1e-5)
    assert jnp.allclose(logits_nt.reshape(B * T, vocab_size), ref_logits, atol=1e-5)
    assert jnp.allclose(loss, ref_loss, atol=1e-5)

    # Larger case: multi-tile grid (2 tiles), packed rows with row padding,
    # the resident table block and the per-tile SMEM loss partials.
    B2, T2 = 3, 100                      # N = 300 -> 75 packed rows -> 2 tiles of 40
    k_x2, k_t2 = jax.random.split(k_t)
    x2 = jax.random.randint(k_x2, (B2, T2), 0, vocab_size, dtype=jnp.int32)
    t2 = jax.random.randint(k_t2, (B2, T2), 0, vocab_size, dtype=jnp.int32)
    logits2, loss2 = bigram_forward(x2, embedding, t2)
    jax.block_until_ready((logits2, loss2))
    ref_logits2, ref_loss2 = reference_forward(x2, embedding, t2)
    assert jnp.allclose(logits2, ref_logits2, atol=1e-5)
    assert jnp.allclose(loss2, ref_loss2, atol=1e-4)

    print("KERNEL_OK")
</pallas_src>

<mosaic_0001>
module attributes {stable_mosaic.version = 11 : i64} {
  func.func @kernel(%arg0: i32, %arg1: memref<8x4xi32, #tpu.memory_space<vmem>>, %arg2: memref<8x4xi32, #tpu.memory_space<vmem>>, %arg3: memref<1x128xf32, #tpu.memory_space<vmem>>, %arg4: memref<128x128xf32, #tpu.memory_space<vmem>>, %arg5: memref<8x128xf32, #tpu.memory_space<vmem>>, %arg6: memref<1x1xf32, #tpu.memory_space<smem>>) attributes {dimension_semantics = [#tpu.dimension_semantics<parallel>], iteration_bounds = array<i64: 1>, scalar_prefetch = 0 : i64, scratch_operands = 0 : i64, tpu.core_type = #tpu.core_type<tc>, window_params = [{transform_indices = @transform_0, window_bounds = array<i64: 8, 4>}, {transform_indices = @transform_1, window_bounds = array<i64: 8, 4>}, {pipeline_mode = #tpu.pipeline_mode<synchronous>, transform_indices = @transform_2, window_bounds = array<i64: 1, 128>}, {pipeline_mode = #tpu.pipeline_mode<synchronous>, transform_indices = @transform_3, window_bounds = array<i64: 128, 128>}, {transform_indices = @transform_4, window_bounds = array<i64: 8, 128>}, {transform_indices = @transform_5, window_bounds = array<i64: 1, 1>}]} {
    %c0 = arith.constant 0 : index
    %c0_0 = arith.constant 0 : index
    %0 = vector.load %arg1[%c0, %c0_0] : memref<8x4xi32, #tpu.memory_space<vmem>>, vector<8x4xi32>
    %1 = tpu.iota {dimensions = array<i32: 1>} : vector<8x128xi32>
    %2 = tpu.iota {dimensions = array<i32: 0>} : vector<8x1xi32>
    %c8_i32 = arith.constant 8 : i32
    %3 = arith.muli %arg0, %c8_i32 : i32
    %4 = vector.broadcast %3 : i32 to vector<8x1xi32>
    %5 = arith.addi %4, %2 : vector<8x1xi32>
    %c4_i32 = arith.constant 4 : i32
    %6 = vector.broadcast %c4_i32 : i32 to vector<8x1xi32>
    %7 = arith.muli %5, %6 : vector<8x1xi32>
    %8 = vector.extract_strided_slice %0 {offsets = [0, 0], sizes = [8, 1], strides = [1, 1]} : vector<8x4xi32> to vector<8x1xi32>
    %9 = vector.broadcast %8 : vector<8x1xi32> to vector<8x128xi32>
    %10 = arith.cmpi eq, %1, %9 : vector<8x128xi32>
    %c0_i32 = arith.constant 0 : i32
    %11 = vector.broadcast %c0_i32 : i32 to vector<8x1xi32>
    %12 = arith.addi %7, %11 : vector<8x1xi32>
    %c16_i32 = arith.constant 16 : i32
    %13 = vector.broadcast %c16_i32 : i32 to vector<8x1xi32>
    %14 = arith.cmpi slt, %12, %13 : vector<8x1xi32>
    %15 = vector.broadcast %14 : vector<8x1xi1> to vector<8x128xi1>
    %16 = arith.andi %10, %15 : vector<8x128xi1>
    %17 = vector.extract_strided_slice %0 {offsets = [0, 1], sizes = [8, 1], strides = [1, 1]} : vector<8x4xi32> to vector<8x1xi32>
    %c32_i32 = arith.constant 32 : i32
    %18 = vector.broadcast %c32_i32 : i32 to vector<8x1xi32>
    %19 = arith.addi %17, %18 : vector<8x1xi32>
    %20 = vector.broadcast %19 : vector<8x1xi32> to vector<8x128xi32>
    %21 = arith.cmpi eq, %1, %20 : vector<8x128xi32>
    %c1_i32 = arith.constant 1 : i32
    %22 = vector.broadcast %c1_i32 : i32 to vector<8x1xi32>
    %23 = arith.addi %7, %22 : vector<8x1xi32>
    %c16_i32_1 = arith.constant 16 : i32
    %24 = vector.broadcast %c16_i32_1 : i32 to vector<8x1xi32>
    %25 = arith.cmpi slt, %23, %24 : vector<8x1xi32>
    %26 = vector.broadcast %25 : vector<8x1xi1> to vector<8x128xi1>
    %27 = arith.andi %21, %26 : vector<8x128xi1>
    %28 = arith.ori %16, %27 : vector<8x128xi1>
    %29 = vector.extract_strided_slice %0 {offsets = [0, 2], sizes = [8, 1], strides = [1, 1]} : vector<8x4xi32> to vector<8x1xi32>
    %c64_i32 = arith.constant 64 : i32
    %30 = vector.broadcast %c64_i32 : i32 to vector<8x1xi32>
    %31 = arith.addi %29, %30 : vector<8x1xi32>
    %32 = vector.broadcast %31 : vector<8x1xi32> to vector<8x128xi32>
    %33 = arith.cmpi eq, %1, %32 : vector<8x128xi32>
    %c2_i32 = arith.constant 2 : i32
    %34 = vector.broadcast %c2_i32 : i32 to vector<8x1xi32>
    %35 = arith.addi %7, %34 : vector<8x1xi32>
    %c16_i32_2 = arith.constant 16 : i32
    %36 = vector.broadcast %c16_i32_2 : i32 to vector<8x1xi32>
    %37 = arith.cmpi slt, %35, %36 : vector<8x1xi32>
    %38 = vector.broadcast %37 : vector<8x1xi1> to vector<8x128xi1>
    %39 = arith.andi %33, %38 : vector<8x128xi1>
    %40 = arith.ori %28, %39 : vector<8x128xi1>
    %41 = vector.extract_strided_slice %0 {offsets = [0, 3], sizes = [8, 1], strides = [1, 1]} : vector<8x4xi32> to vector<8x1xi32>
    %c96_i32 = arith.constant 96 : i32
    %42 = vector.broadcast %c96_i32 : i32 to vector<8x1xi32>
    %43 = arith.addi %41, %42 : vector<8x1xi32>
    %44 = vector.broadcast %43 : vector<8x1xi32> to vector<8x128xi32>
    %45 = arith.cmpi eq, %1, %44 : vector<8x128xi32>
    %c3_i32 = arith.constant 3 : i32
    %46 = vector.broadcast %c3_i32 : i32 to vector<8x1xi32>
    %47 = arith.addi %7, %46 : vector<8x1xi32>
    %c16_i32_3 = arith.constant 16 : i32
    %48 = vector.broadcast %c16_i32_3 : i32 to vector<8x1xi32>
    %49 = arith.cmpi slt, %47, %48 : vector<8x1xi32>
    %50 = vector.broadcast %49 : vector<8x1xi1> to vector<8x128xi1>
    %51 = arith.andi %45, %50 : vector<8x128xi1>
    %52 = arith.ori %40, %51 : vector<8x128xi1>
    %53 = arith.extui %52 : vector<8x128xi1> to vector<8x128xi32>
    %54 = arith.sitofp %53 : vector<8x128xi32> to vector<8x128xf32>
    %c0_4 = arith.constant 0 : index
    %c0_5 = arith.constant 0 : index
    %55 = vector.load %arg4[%c0_4, %c0_5] : memref<128x128xf32, #tpu.memory_space<vmem>>, vector<128x128xf32>
    %cst = arith.constant dense<0.000000e+00> : vector<8x128xf32>
    %56 = tpu.matmul %54, %55, %cst {dimension_numbers = #tpu.dot_dimension_numbers<[1], [0], [0], [1], [0, 0, 1, 1], [], []>} : vector<8x128xf32>, vector<128x128xf32>, vector<8x128xf32> -> vector<8x128xf32>
    %c0_6 = arith.constant 0 : index
    %c0_7 = arith.constant 0 : index
    %57 = vector.load %arg5[%c0_6, %c0_7] : memref<8x128xf32, #tpu.memory_space<vmem>>, vector<8x128xf32>
    tpu.vector_store %arg5[%c0_6, %c0_7], %56 {strides = array<i32>} : memref<8x128xf32, #tpu.memory_space<vmem>>, vector<8x128xf32>,
    %c0_8 = arith.constant 0 : index
    %c0_9 = arith.constant 0 : index
    %58 = vector.load %arg3[%c0_8, %c0_9] : memref<1x128xf32, #tpu.memory_space<vmem>>, vector<1x128xf32>
    %59 = vector.broadcast %58 : vector<1x128xf32> to vector<8x128xf32>
    %60 = arith.mulf %54, %59 : vector<8x128xf32>
    %c0_10 = arith.constant 0 : index
    %c0_11 = arith.constant 0 : index
    %61 = vector.load %arg2[%c0_10, %c0_11] : memref<8x4xi32, #tpu.memory_space<vmem>>, vector<8x4xi32>
    %62 = tpu.iota {dimensions = array<i32: 1>} : vector<8x128xi32>
    %63 = vector.extract_strided_slice %61 {offsets = [0, 0], sizes = [8, 1], strides = [1, 1]} : vector<8x4xi32> to vector<8x1xi32>
    %64 = vector.broadcast %63 : vector<8x1xi32> to vector<8x128xi32>
    %65 = arith.cmpi eq, %62, %64 : vector<8x128xi32>
    %66 = vector.extract_strided_slice %61 {offsets = [0, 1], sizes = [8, 1], strides = [1, 1]} : vector<8x4xi32> to vector<8x1xi32>
    %c32_i32_12 = arith.constant 32 : i32
    %67 = vector.broadcast %c32_i32_12 : i32 to vector<8x1xi32>
    %68 = arith.addi %66, %67 : vector<8x1xi32>
    %69 = vector.broadcast %68 : vector<8x1xi32> to vector<8x128xi32>
    %70 = arith.cmpi eq, %62, %69 : vector<8x128xi32>
    %71 = arith.ori %65, %70 : vector<8x128xi1>
    %72 = vector.extract_strided_slice %61 {offsets = [0, 2], sizes = [8, 1], strides = [1, 1]} : vector<8x4xi32> to vector<8x1xi32>
    %c64_i32_13 = arith.constant 64 : i32
    %73 = vector.broadcast %c64_i32_13 : i32 to vector<8x1xi32>
    %74 = arith.addi %72, %73 : vector<8x1xi32>
    %75 = vector.broadcast %74 : vector<8x1xi32> to vector<8x128xi32>
    %76 = arith.cmpi eq, %62, %75 : vector<8x128xi32>
    %77 = arith.ori %71, %76 : vector<8x128xi1>
    %78 = vector.extract_strided_slice %61 {offsets = [0, 3], sizes = [8, 1], strides = [1, 1]} : vector<8x4xi32> to vector<8x1xi32>
    %c96_i32_14 = arith.constant 96 : i32
    %79 = vector.broadcast %c96_i32_14 : i32 to vector<8x1xi32>
    %80 = arith.addi %78, %79 : vector<8x1xi32>
    %81 = vector.broadcast %80 : vector<8x1xi32> to vector<8x128xi32>
    %82 = arith.cmpi eq, %62, %81 : vector<8x128xi32>
    %83 = arith.ori %77, %82 : vector<8x128xi1>
    %cst_15 = arith.constant 0.000000e+00 : f32
    %84 = vector.broadcast %cst_15 : f32 to vector<8x128xf32>
    %85 = arith.select %83, %56, %84 : vector<8x128xi1>, vector<8x128xf32>
    %86 = vector.shape_cast %60 : vector<8x128xf32> to vector<1x8x128xf32>
    %cst_16 = arith.constant dense<0.000000e+00> : vector<1xf32>
    %87 = vector.multi_reduction <add>, %86, %cst_16 [1, 2] : vector<1x8x128xf32> to vector<1xf32>
    %88 = vector.shape_cast %87 : vector<1xf32> to vector<1x1x1xf32>
    %89 = vector.extract %88[0, 0, 0] : f32 from vector<1x1x1xf32>
    %90 = vector.shape_cast %85 : vector<8x128xf32> to vector<1x8x128xf32>
    %cst_17 = arith.constant dense<0.000000e+00> : vector<1xf32>
    %91 = vector.multi_reduction <add>, %90, %cst_17 [1, 2] : vector<1x8x128xf32> to vector<1xf32>
    %92 = vector.shape_cast %91 : vector<1xf32> to vector<1x1x1xf32>
    %93 = vector.extract %92[0, 0, 0] : f32 from vector<1x1x1xf32>
    %94 = arith.subf %89, %93 : f32
    %c0_18 = arith.constant 0 : index
    %c0_19 = arith.constant 0 : index
    %95 = memref.load %arg6[%c0_18, %c0_19] : memref<1x1xf32, #tpu.memory_space<smem>>
    memref.store %94, %arg6[%c0_18, %c0_19] : memref<1x1xf32, #tpu.memory_space<smem>>
    return
  }
  func.func @transform_0(%arg0: i32) -> (i32, i32) {
    %c0_i32 = arith.constant 0 : i32
    %c0_i32_0 = arith.constant 0 : i32
    return %arg0, %c0_i32 : i32, i32
  }
  func.func @transform_1(%arg0: i32) -> (i32, i32) {
    %c0_i32 = arith.constant 0 : i32
    %c0_i32_0 = arith.constant 0 : i32
    return %arg0, %c0_i32 : i32, i32
  }
  func.func @transform_2(%arg0: i32) -> (i32, i32) {
    %c0_i32 = arith.constant 0 : i32
    %c0_i32_0 = arith.constant 0 : i32
    %c0_i32_1 = arith.constant 0 : i32
    return %c0_i32, %c0_i32_0 : i32, i32
  }
  func.func @transform_3(%arg0: i32) -> (i32, i32) {
    %c0_i32 = arith.constant 0 : i32
    %c0_i32_0 = arith.constant 0 : i32
    %c0_i32_1 = arith.constant 0 : i32
    return %c0_i32, %c0_i32_0 : i32, i32
  }
  func.func @transform_4(%arg0: i32) -> (i32, i32) {
    %c0_i32 = arith.constant 0 : i32
    %c0_i32_0 = arith.constant 0 : i32
    return %arg0, %c0_i32 : i32, i32
  }
  func.func @transform_5(%arg0: i32) -> (i32, i32) {
    %c0_i32 = arith.constant 0 : i32
    %c0_i32_0 = arith.constant 0 : i32
    return %arg0, %c0_i32 : i32, i32
  }
}

</mosaic_0001>

<llo_original>
// kernel: tile.8
$region0: #{tile.8}
  #allocation0 [shape = 's32[1]{0}', space=sflag, size = 0x4, scoped, tag = 'scoped memory for tile.8']
  %s0 = inlined_call_operand.vmem [shape: f32[32], index: 0, kind: input, shape index: {}]
  %s1 = inlined_call_operand.vmem [shape: f32[4,32], index: 1, kind: output, shape index: {}]
  // Predicated region
  $region2: #{tile.8} parent=0 // pred_check
    _
  $region3: #{tile.8} parent=0 // pred_check_branch
    %3 = sbr.rel (0) target = $region5
  $region4: #{tile.8} parent=0 // pred_region
    _
  $region5: #{tile.8} parent=0 // pred_fallthru
    _
  %v4 = vld [vmem:[%s0] ss:$0 sm:$0xff]
  %5 = vst [vmem:[%s1] sm:$0xf] %v4

// kernel: tile.9
$region0: #{tile.9}
  %s0 = inlined_call_operand.vmem [shape: f32[4,32], index: 0, kind: input, shape index: {}]
  %s1 = inlined_call_operand.vmem [shape: f32[1,128], index: 1, kind: output, shape index: {}]
  $region1: #{tile.9} parent=0
    #allocation0 [shape = 'u8[4096]{0}', space=vmem, size = 0x1000, scoped, tag = 'scoped mem for output reshape']
    #allocation1 [shape = 'u8[4096]{0}', space=vmem, size = 0x1000, scoped, tag = 'scoped mem for input reshape']
    %s3 = ssub.s32 16, 1
    %v4 = vld [vmem:[%s0] sm:%s3]
    %5 = vst [vmem:[#allocation1] sm:%s3] %v4
    %v6 = vld [vmem:[#allocation1] sm:$0x1]
    %vm7 = vcmask 261120
    %8 = vst.msk [vmem:[#allocation0] sm:$0x1] %vm7, %v6
    %s9 = scalar_lea.vmem [#allocation1], 3
    %v10 = vld [vmem:[%s9] sm:$0x1]
    %11 = vrot.lane.b32.xlu0 %v10, 96
    %v12 = vpop.permute.xlu0 %11
    %vm13 = vcmask 1048320
    %14 = vst.msk [vmem:[#allocation0] sm:$0x1] %vm13, %v12
    %s15 = scalar_lea.vmem [#allocation1], 2
    %v16 = vld [vmem:[%s15] sm:$0x1]
    %17 = vrot.lane.b32.xlu0 %v16, 64
    %v18 = vpop.permute.xlu0 %17
    %vm19 = vcmask 785920
    %20 = vst.msk [vmem:[#allocation0] sm:$0x1] %vm19, %v18
    %s21 = scalar_lea.vmem [#allocation1], 1
    %v22 = vld [vmem:[%s21] sm:$0x1]
    %23 = vrot.lane.b32.xlu0 %v22, 32
    %v24 = vpop.permute.xlu0 %23
    %vm25 = vcmask 523520
    %26 = vst.msk [vmem:[#allocation0] sm:$0x1] %vm25, %v24
    %s28 = ssub.s32 2, 1
    %v29 = vld [vmem:[#allocation0] sm:%s28]
    %s31 = ssub.s32 2, 1
    %32 = vst [vmem:[%s1] sm:%s31] %v29

// kernel: _bigram_forward_impl.1
$region0: #{_bigram_forward_impl.1}
  #allocation0 [shape = 'u32[]', space=smem, size = 0x4, offset = 0x4, fixed_abs, tag = 'smem constant byte address 0x4 - core index']
  #allocation1 [shape = 'u32[72,128]{1,0:T(1,128)}', space=vmem, size = 0x9000, scoped, tag = 'internal scratch']
  %s0 = inlined_call_operand.vmem [shape: s32[8,4], index: 0, kind: input, shape index: {}]
  %s1 = inlined_call_operand.vmem [shape: s32[8,4], index: 1, kind: input, shape index: {}]
  %s2 = inlined_call_operand.vmem [shape: f32[1,128], index: 2, kind: input, shape index: {}]
  %s3 = inlined_call_operand.vmem [shape: f32[128,128], index: 3, kind: input, shape index: {}]
  %s4 = inlined_call_operand.vmem [shape: f32[8,128], index: 4, kind: output, shape index: {0}]
  %s5 = inlined_call_operand.hbm [shape: f32[1,1], index: 5, kind: output, shape index: {1}]
  %6 = xla_tuple %s4, %s5
  %s7 = sld [smem:[#allocation0]]
  $region34: #{_bigram_forward_impl.1} parent=0
    _
  %s9 = ssub.s32 1, %s7
  %s10 = scalar_select 0, %s9, %s7
  $region1: #{_bigram_forward_impl.1} parent=0
    #allocation2 [shape = 'u8[512]{0}', space=smem, size = 0x200, scoped, tag = 'output window, operand 1, single buffered']
    #allocation3 [shape = 's32[1]{0}', space=sflag, size = 0x4, scoped, tag = 'scoped memory for _bigram_forward_impl.1']
    %11 = vsyncpa [#allocation3], 0
    // Predicated region
    $region2: #{_bigram_forward_impl.1} parent=1 // pred_check
      _
    $region3: #{_bigram_forward_impl.1} parent=1 // pred_check_branch
      %13 = sbr.rel (0) target = $region5
    $region4: #{_bigram_forward_impl.1} parent=1 // pred_region
      _
    $region5: #{_bigram_forward_impl.1} parent=1 // pred_fallthru
      _
    // Predicated region
    $region6: #{_bigram_forward_impl.1} parent=1 // pred_check
      _
    $region7: #{_bigram_forward_impl.1} parent=1 // pred_check_branch
      %15 = sbr.rel (0) target = $region9
    $region8: #{_bigram_forward_impl.1} parent=1 // pred_region
      _
    $region9: #{_bigram_forward_impl.1} parent=1 // pred_fallthru
      _
    // Predicated region
    $region10: #{_bigram_forward_impl.1} parent=1 // pred_check
      _
    $region11: #{_bigram_forward_impl.1} parent=1 // pred_check_branch
      %17 = sbr.rel (0) target = $region13
    $region12: #{_bigram_forward_impl.1} parent=1 // pred_region
      _
    $region13: #{_bigram_forward_impl.1} parent=1 // pred_fallthru
      _
    // Predicated region
    $region14: #{_bigram_forward_impl.1} parent=1 // pred_check
      _
    $region15: #{_bigram_forward_impl.1} parent=1 // pred_check_branch
      %19 = sbr.rel (0) target = $region17
    $region16: #{_bigram_forward_impl.1} parent=1 // pred_region
      _
    $region17: #{_bigram_forward_impl.1} parent=1 // pred_fallthru
      _
    %v20 = vld [vmem:[%s0] sm:$0xff]
    %v21 = vlaneseq
    %v22 = vand.u32 %v21, 127
    %v23 = vlaneseq
    %v24 = vshrl.u32 %v23, 7
    %s25 = smul.u32 0, 8
    %v26 = vstv %s25
    %v27 = vadd.s32 %v26, %v24
    %v28 = vmul.u32 %v27, 4
    %29 = vset.pattern.permute.xlu0 0
    %30 = vperm.xlu0 %29, %v20
    %v31 = vpop.permute.xlu0 %30
    %vm32 = vcmp.eq.s32.totalorder %v22, %v31
    %vm33 = vcmp.lt.s32.totalorder %v28, 16
    %v34 = vsel %vm33, 1, 0
    %vm35 = vcmp.eq.s32.totalorder %v34, 1
    %vm36 = vmand %vm32, %vm35
    %v37 = vadd.s32 %v20, 32
    %38 = vset.pattern.permute.xlu0 1
    %39 = vperm.xlu0 %38, %v37
    %v40 = vpop.permute.xlu0 %39
    %vm41 = vcmp.eq.s32.totalorder %v22, %v40
    %v42 = vadd.s32 %v28, 1
    %vm43 = vcmp.lt.s32.totalorder %v42, 16
    %v44 = vsel %vm43, 1, 0
    %vm45 = vcmp.eq.s32.totalorder %v44, 1
    %vm46 = vmand %vm41, %vm45
    %vm47 = vmor %vm36, %vm46
    %v48 = vadd.s32 %v20, 64
    %49 = vset.pattern.permute.xlu0 2
    %50 = vperm.xlu0 %49, %v48
    %v51 = vpop.permute.xlu0 %50
    %vm52 = vcmp.eq.s32.totalorder %v22, %v51
    %v53 = vadd.s32 %v28, 2
    %vm54 = vcmp.lt.s32.totalorder %v53, 16
    %v55 = vsel %vm54, 1, 0
    %vm56 = vcmp.eq.s32.totalorder %v55, 1
    %vm57 = vmand %vm52, %vm56
    %vm58 = vmor %vm47, %vm57
    %v59 = vadd.s32 %v20, 96
    %60 = vset.pattern.permute.xlu0 3
    %61 = vperm.xlu0 %60, %v59
    %v62 = vpop.permute.xlu0 %61
    %vm63 = vcmp.eq.s32.totalorder %v22, %v62
    %v64 = vadd.s32 %v28, 3
    %vm65 = vcmp.lt.s32.totalorder %v64, 16
    %v66 = vsel %vm65, 1, 0
    %vm67 = vcmp.eq.s32.totalorder %v66, 1
    %vm68 = vmand %vm63, %vm67
    %vm69 = vmor %vm58, %vm68
    %v70 = vsel %vm69, 1, 0
    %v71 = vcvt.s32.f32 %v70
    %v72 = vld [vmem:[%s3] sm:$0xff]
    %v73 = vld [vmem:[%s3 + $0x8] sm:$0xff]
    %v74 = vld [vmem:[%s3 + $0x10] sm:$0xff]
    %v75 = vld [vmem:[%s3 + $0x18] sm:$0xff]
    %v76 = vld [vmem:[%s3 + $0x20] sm:$0xff]
    %v77 = vld [vmem:[%s3 + $0x28] sm:$0xff]
    %v78 = vld [vmem:[%s3 + $0x30] sm:$0xff]
    %v79 = vld [vmem:[%s3 + $0x38] sm:$0xff]
    %v80 = vld [vmem:[%s3 + $0x40] sm:$0xff]
    %v81 = vld [vmem:[%s3 + $0x48] sm:$0xff]
    %v82 = vld [vmem:[%s3 + $0x50] sm:$0xff]
    %v83 = vld [vmem:[%s3 + $0x58] sm:$0xff]
    %v84 = vld [vmem:[%s3 + $0x60] sm:$0xff]
    %v85 = vld [vmem:[%s3 + $0x68] sm:$0xff]
    %v86 = vld [vmem:[%s3 + $0x70] sm:$0xff]
    %v87 = vld [vmem:[%s3 + $0x78] sm:$0xff]
    %88 = vmatpush.msra.mxu0 %v87
    %89 = vmatpush.msra.mxu0 %v86
    %90 = vmatpush.msra.mxu0 %v85
    %91 = vmatpush.msra.mxu0 %v84
    %92 = vmatpush.msra.mxu0 %v83
    %93 = vmatpush.msra.mxu0 %v82
    %94 = vmatpush.msra.mxu0 %v81
    %95 = vmatpush.msra.mxu0 %v80
    %96 = vmatpush.msra.mxu0 %v79
    %97 = vmatpush.msra.mxu0 %v78
    %98 = vmatpush.msra.mxu0 %v77
    %99 = vmatpush.msra.mxu0 %v76
    %100 = vmatpush.msra.mxu0 %v75
    %101 = vmatpush.msra.mxu0 %v74
    %102 = vmatpush.msra.mxu0 %v73
    %103 = vmatpush.msra.mxu0 %v72
    %104 = vmatmul.f32.gmra.mxu0 %v71
    %v105 = vpop.f32.mrf.mxu0
    %v106 = vadd.f32 0.0, %v105
    %107 = vdwg.mxu0
    %108 = vst [vmem:[%s4] sm:$0xff] %v106
    %v109 = vld [vmem:[%s2] sm:$0x1]
    %v111 = vperm.slane %v109, 0
    %v113 = vmul.f32 %v71, %v111
    %v114 = vld [vmem:[%s1] sm:$0xff]
    %115 = vset.pattern.permute.xlu0 0
    %116 = vperm.xlu0 %115, %v114
    %v117 = vpop.permute.xlu0 %116
    %vm118 = vcmp.eq.s32.totalorder %v22, %v117
    %v119 = vadd.s32 %v114, 32
    %120 = vset.pattern.permute.xlu0 1
    %121 = vperm.xlu0 %120, %v119
    %v122 = vpop.permute.xlu0 %121
    %vm123 = vcmp.eq.s32.totalorder %v22, %v122
    %vm124 = vmor %vm118, %vm123
    %v125 = vadd.s32 %v114, 64
    %126 = vset.pattern.permute.xlu0 2
    %127 = vperm.xlu0 %126, %v125
    %v128 = vpop.permute.xlu0 %127
    %vm129 = vcmp.eq.s32.totalorder %v22, %v128
    %vm130 = vmor %vm124, %vm129
    %v131 = vadd.s32 %v114, 96
    %132 = vset.pattern.permute.xlu0 3
    %133 = vperm.xlu0 %132, %v131
    %v134 = vpop.permute.xlu0 %133
    %vm135 = vcmp.eq.s32.totalorder %v22, %v134
    %vm136 = vmor %vm130, %vm135
    %v137 = vsel %vm136, %v106, 0.0
    %138 = vadd.xlane.f32.xlu0 %v113
    %v139 = vpop.xlane.xlu0 %138
    %v140 = vrot.slane %v139, 4
    %v141 = vadd.f32 %v139, %v140
    %v142 = vrot.slane %v141, 2
    %v143 = vadd.f32 %v141, %v142
    %v144 = vrot.slane %v143, 1
    %v145 = vadd.f32 %v143, %v144
    %s146 = vtos %v145
    %147 = vadd.xlane.f32.xlu0 %v137
    %v148 = vpop.xlane.xlu0 %147
    %v149 = vrot.slane %v148, 4
    %v150 = vadd.f32 %v148, %v149
    %v151 = vrot.slane %v150, 2
    %v152 = vadd.f32 %v150, %v151
    %v153 = vrot.slane %v152, 1
    %v154 = vadd.f32 %v152, %v153
    %s155 = vtos %v154
    %s156 = ssub.f32 %s146, %s155
    %s157 = scalar_lea.smem [#allocation2], 0
    %158 = sst [smem:[%s157]] %s156
    // Predicated region
    $region18: #{_bigram_forward_impl.1} parent=1 // pred_check
      _
    $region19: #{_bigram_forward_impl.1} parent=1 // pred_check_branch
      %160 = sbr.rel (0) target = $region21
    $region20: #{_bigram_forward_impl.1} parent=1 // pred_region
      _
    $region21: #{_bigram_forward_impl.1} parent=1 // pred_fallthru
      _
    // Predicated region
    $region22: #{_bigram_forward_impl.1} parent=1 // pred_check
      _
    $region23: #{_bigram_forward_impl.1} parent=1 // pred_check_branch
      %162 = sbr.rel (0) target = $region25
    $region24: #{_bigram_forward_impl.1} parent=1 // pred_region
      %164 = vsyncadd [#allocation3], 0
      %s166 = sshll.u32 %s5, 4
      %s167 = int_to_ptr.hbm [resolvable:$true] %s166
      %169 = dma.smem_to_hbm [#allocation2], 16, %s167, [#allocation3]
    $region25: #{_bigram_forward_impl.1} parent=1 // pred_fallthru
      _
    // Predicated region
    $region26: #{_bigram_forward_impl.1} parent=1 // pred_check
      _
    $region27: #{_bigram_forward_impl.1} parent=1 // pred_check_branch
      %171 = sbr.rel (0) target = $region29
    $region28: #{_bigram_forward_impl.1} parent=1 // pred_region
      _
    $region29: #{_bigram_forward_impl.1} parent=1 // pred_fallthru
      _
    // Predicated region
    $region30: #{_bigram_forward_impl.1} parent=1 // pred_check
      _
    $region31: #{_bigram_forward_impl.1} parent=1 // pred_check_branch
      %173 = sbr.rel (0) target = $region33
    $region32: #{_bigram_forward_impl.1} parent=1 // pred_region
      %175 = dma.done [#allocation3], 16
    $region33: #{_bigram_forward_impl.1} parent=1 // pred_fallthru
      _
    %176 = sfence
    %177 = vsyncpa [#allocation3], 1

</llo_original>
